<compile_context>
chip_gen: v6e
topology: v6e:2x2x1
jax: 0.10.0
libtpu: 0.0.40
codegen_flags: <defaults>
</compile_context>

<pallas_src>
import functools
import math

import jax
import jax.numpy as jnp
from jax.experimental import pallas as pl
from jax.experimental.pallas import tpu as pltpu

# Physical constants (SI) — the registered buffers of the torch module.
_PLANCK = 6.62607015e-34          # J*s
_LIGHT_SPEED = 299792458.0        # m/s
_BOLTZMANN = 1.380649e-23         # J/K
_EXP_PARA = _PLANCK * _LIGHT_SPEED / _BOLTZMANN   # h*c/k  (meter * Kelvin)
_C = _LIGHT_SPEED                                  # self.c in the module


# ------------------------------------------------------------------------ kernel bodies
def _planck_factored_kernel(t_ref, w_ref, o_ref, *, approx_recip=False):
    """Planck body for the (semi-)separable paths.

    At least one of t_ref / w_ref is narrow (scalar, (tile_r, 1) column or
    (1, tile_c) row); EUP work on narrow operands is negligible, so the tile-wide
    cost is one exp + one reciprocal per element (plus cheap VPU multiplies).
    """
    t = t_ref[...].astype(jnp.float32)
    w = w_ref[...].astype(jnp.float32)
    inv_t = 1.0 / t                       # narrow in the common (t-column) case
    a = _EXP_PARA / w                     # exact divide; narrow when w is narrow
    w2 = w * w
    coef = (2.0 * _C) / (w2 * w2)         # narrow when w is narrow
    x = a * inv_t                         # full-tile broadcast multiply (VPU)
    em1 = jnp.exp(x) - 1.0                # full-tile EUP exp
    inv = pl.reciprocal(em1, approx=True) if approx_recip else 1.0 / em1
    o_ref[...] = (coef * inv).astype(o_ref.dtype)


def _planck_dense_kernel(t_ref, w_ref, o_ref, *, approx_recip=False):
    """Planck body when both operands genuinely vary over both tile axes (fallback)."""
    t = t_ref[...].astype(jnp.float32)
    w = w_ref[...].astype(jnp.float32)
    x = _EXP_PARA / (w * t)               # keep the divide feeding exp exact
    w2 = w * w
    denom = (jnp.exp(x) - 1.0) * (w2 * w2)
    if approx_recip:
        o_ref[...] = ((2.0 * _C) * pl.reciprocal(denom, approx=True)).astype(o_ref.dtype)
    else:
        o_ref[...] = ((2.0 * _C) / denom).astype(o_ref.dtype)


# ---------------------------------------------------------------------------- wrapper
def _pick_tile(dim, target):
    # Block dim equal to the full array dim is exempt from the (8, 128) rule;
    # otherwise use the aligned target and let the pl.cdiv grid handle the ragged edge.
    return dim if dim <= target else target


def planck_exponential(temperature, wavelength, *, approx_reciprocal=False):
    """Pallas TPU forward of the `Exponential` module (torch broadcasting semantics)."""
    temperature = jnp.asarray(temperature)
    wavelength = jnp.asarray(wavelength)

    out_shape = tuple(int(d) for d in jnp.broadcast_shapes(temperature.shape, wavelength.shape))
    out_dtype = jnp.result_type(temperature.dtype, wavelength.dtype)
    if not jnp.issubdtype(out_dtype, jnp.floating):
        out_dtype = jnp.float32
    itemsize = jnp.dtype(out_dtype).itemsize

    # ---- lane-friendly 2-D view of the broadcast problem ------------------------------
    # Squeeze trailing size-1 dims so a narrow last axis (e.g. scalar wavelength) does
    # not force masked (sub-128-lane) partial stores.
    n_trail_ones = 0
    for d in reversed(out_shape):
        if d == 1:
            n_trail_ones += 1
        else:
            break
    work_shape = out_shape[:len(out_shape) - n_trail_ones]

    def _drop_trailing(x):
        nd = min(n_trail_ones, x.ndim)
        return x.reshape(x.shape[:x.ndim - nd]) if nd else x

    t_w = _drop_trailing(temperature).astype(out_dtype)
    w_w = _drop_trailing(wavelength).astype(out_dtype)

    if len(work_shape) == 0:
        rows, cols = 1, 1
    else:
        cols = int(work_shape[-1])
        rows = int(math.prod(work_shape[:-1])) if len(work_shape) > 1 else 1

    # Large 1-D problems: fold the single axis into (rows, cols) so sublanes and lanes
    # are both dense (up to 8x denser stores than a (1, N) layout).
    folded = False
    if rows == 1 and cols > 1024:
        for c2 in (1024, 512, 256, 128):
            if cols % c2 == 0:
                rows, cols = cols // c2, c2
                folded = True
                break

    lead_shape = work_shape[:-1] if len(work_shape) > 0 else ()

    def _classify(x):
        """Return the 2-D representation + kind ('scalar' | 'col' | 'row' | 'full')."""
        if x.size == 1:
            return x.reshape(1, 1), "scalar"
        if folded:                                   # the whole problem is 1-D
            return x.reshape(rows, cols), "full"
        const_cols = int(x.shape[-1]) == 1
        const_rows = (x.ndim <= 1) or all(int(d) == 1 for d in x.shape[:-1])
        if const_cols:                               # varies only over leading dims
            lead = x.reshape(x.shape[:-1])
            return jnp.broadcast_to(lead, lead_shape).reshape(rows, 1), "col"
        if const_rows:                               # varies only over the last dim
            return x.reshape(1, cols), "row"
        # Mixed broadcast over the leading axes: must be materialized (rare fallback).
        return jnp.broadcast_to(x, work_shape).reshape(rows, cols), "full"

    t2, t_kind = _classify(t_w)
    w2, w_kind = _classify(w_w)
    dense = (t_kind == "full") and (w_kind == "full")

    # ---- tiling ------------------------------------------------------------------------
    # 1 full stream (output only): 1024x1024 f32 = 4 MiB/buffer (8 MiB double-buffered).
    # 2-3 full streams: 512x1024 keeps the double-buffered footprint <= 12 MiB.
    n_full = 1 + (t_kind == "full") + (w_kind == "full")
    target_r = 1024 if n_full == 1 else 512
    target_c = 1024
    tile_r = _pick_tile(rows, target_r)
    tile_c = _pick_tile(cols, target_c)
    grid = (pl.cdiv(rows, tile_r), pl.cdiv(cols, tile_c))

    # v7x has 2 TensorCores: make sure a non-trivial single-tile problem still exposes
    # >= 2 programs along a "parallel" axis.
    if grid == (1, 1) and rows * cols >= 32768:
        if rows >= 16:
            tile_r = ((rows + 1) // 2 + 7) // 8 * 8
        elif cols >= 256:
            tile_c = ((cols + 1) // 2 + 127) // 128 * 128
        grid = (pl.cdiv(rows, tile_r), pl.cdiv(cols, tile_c))

    # TODO(synk): a genuinely 2-D output with 1 < cols < 128 still lowers to masked
    # partial-lane stores; fixing it needs a layout-changing transpose whose extra HBM
    # traffic outweighs the store-path saving for this elementwise kernel.

    def _spec(kind):
        if kind == "scalar":
            return pl.BlockSpec((1, 1), lambda i, j: (0, 0))
        if kind == "col":
            return pl.BlockSpec((tile_r, 1), lambda i, j: (i, 0))
        if kind == "row":
            return pl.BlockSpec((1, tile_c), lambda i, j: (0, j))
        return pl.BlockSpec((tile_r, tile_c), lambda i, j: (i, j))

    in_specs = [_spec(t_kind), _spec(w_kind)]
    out_spec = pl.BlockSpec((tile_r, tile_c), lambda i, j: (i, j))

    n_elems = rows * cols
    cost = pl.CostEstimate(
        flops=8 * n_elems,
        transcendentals=(3 if dense else 2) * n_elems,      # exp + reciprocal(s)
        bytes_accessed=itemsize * (n_elems + int(t2.size) + int(w2.size)),
    )

    kernel = _planck_dense_kernel if dense else _planck_factored_kernel
    kernel = functools.partial(kernel, approx_recip=approx_reciprocal)

    out2 = pl.pallas_call(
        kernel,
        out_shape=jax.ShapeDtypeStruct((rows, cols), out_dtype),
        grid_spec=pltpu.PrefetchScalarGridSpec(
            num_scalar_prefetch=0,
            grid=grid,
            in_specs=in_specs,
            out_specs=out_spec,
        ),
        compiler_params=pltpu.CompilerParams(
            dimension_semantics=("parallel", "parallel"),
            vmem_limit_bytes=32 * 1024 * 1024,   # explicit: safe on v5e/v6e/v7x
        ),
        cost_estimate=cost,
    )(t2, w2)

    return out2.reshape(out_shape)


def planck_reference(temperature, wavelength):
    """Pure-JAX reference (mirrors the torch forward exactly)."""
    return 2.0 * _C / (jnp.exp(_EXP_PARA / (wavelength * temperature)) - 1.0) \
        / jnp.power(wavelength, 4)


if __name__ == "__main__":
    key = jax.random.PRNGKey(0)
    k1, k2 = jax.random.split(key)

    def _check(out, ref, name):
        assert out.shape == ref.shape, (name, out.shape, ref.shape)
        assert jnp.allclose(out, ref, rtol=2e-5, atol=0.0), f"{name} mismatch vs reference"

    # 1) Fully separable fast path: temperature (16,1) K, wavelength (1,256) m (4-19 um).
    temperature = 250.0 + 100.0 * jax.random.uniform(k1, (16, 1), dtype=jnp.float32)
    wavelength = 4.0e-6 + 15.0e-6 * jax.random.uniform(k2, (1, 256), dtype=jnp.float32)
    out = jax.block_until_ready(planck_exponential(temperature, wavelength))
    _check(out, planck_reference(temperature, wavelength), "separable")

    # 2) Semi-separable path: temperature genuinely 2-D, wavelength rank-1 (stays narrow).
    t_semi = 250.0 + 100.0 * jax.random.uniform(k1, (16, 256), dtype=jnp.float32)
    w_semi = 4.0e-6 + 15.0e-6 * jax.random.uniform(k2, (256,), dtype=jnp.float32)
    out_s = jax.block_until_ready(planck_exponential(t_semi, w_semi))
    _check(out_s, planck_reference(t_semi, w_semi), "semi-separable")

    # 3) Dense fallback: both operands vary over both axes.
    t_dense = 250.0 + 100.0 * jax.random.uniform(k1, (16, 256), dtype=jnp.float32)
    w_dense = 4.0e-6 + 15.0e-6 * jax.random.uniform(k2, (16, 256), dtype=jnp.float32)
    out_d = jax.block_until_ready(planck_exponential(t_dense, w_dense))
    _check(out_d, planck_reference(t_dense, w_dense), "dense")

    # 4) Scalar wavelength -> trailing size-1 output dim gets squeezed to a lane-dense view.
    t_col = 250.0 + 100.0 * jax.random.uniform(k1, (64, 1), dtype=jnp.float32)
    w_scalar = jnp.float32(1.0e-5)
    out_c = jax.block_until_ready(planck_exponential(t_col, w_scalar))
    _check(out_c, planck_reference(t_col, w_scalar), "scalar-wavelength")

    print("KERNEL_OK")
</pallas_src>

<mosaic_0001>
module attributes {stable_mosaic.version = 11 : i64} {
  func.func @_planck_factored_kernel(%arg0: i32, %arg1: i32, %arg2: memref<16x1xf32, #tpu.memory_space<vmem>>, %arg3: memref<1x256xf32, #tpu.memory_space<vmem>>, %arg4: memref<16x256xf32, #tpu.memory_space<vmem>>) attributes {dimension_semantics = [#tpu.dimension_semantics<parallel>, #tpu.dimension_semantics<parallel>], iteration_bounds = array<i64: 1, 1>, scalar_prefetch = 0 : i64, scratch_operands = 0 : i64, tpu.core_type = #tpu.core_type<tc>, window_params = [{transform_indices = @transform_0, window_bounds = array<i64: 16, 1>}, {transform_indices = @transform_1, window_bounds = array<i64: 1, 256>}, {transform_indices = @transform_2, window_bounds = array<i64: 16, 256>}]} {
    %c0 = arith.constant 0 : index
    %c0_0 = arith.constant 0 : index
    %0 = vector.load %arg2[%c0, %c0_0] : memref<16x1xf32, #tpu.memory_space<vmem>>, vector<16x1xf32>
    %c0_1 = arith.constant 0 : index
    %c0_2 = arith.constant 0 : index
    %1 = vector.load %arg3[%c0_1, %c0_2] : memref<1x256xf32, #tpu.memory_space<vmem>>, vector<1x256xf32>
    %cst = arith.constant 1.000000e+00 : f32
    %2 = vector.broadcast %cst : f32 to vector<16x1xf32>
    %3 = arith.divf %2, %0 : vector<16x1xf32>
    %cst_3 = arith.constant 0.0143877687 : f32
    %4 = vector.broadcast %cst_3 : f32 to vector<1x256xf32>
    %5 = arith.divf %4, %1 : vector<1x256xf32>
    %6 = arith.mulf %1, %1 : vector<1x256xf32>
    %7 = arith.mulf %6, %6 : vector<1x256xf32>
    %cst_4 = arith.constant 0x4E0EF3C2 : f32
    %8 = vector.broadcast %cst_4 : f32 to vector<1x256xf32>
    %9 = arith.divf %8, %7 : vector<1x256xf32>
    %10 = vector.broadcast %5 : vector<1x256xf32> to vector<16x256xf32>
    %11 = vector.broadcast %3 : vector<16x1xf32> to vector<16x256xf32>
    %12 = arith.mulf %10, %11 : vector<16x256xf32>
    %13 = math.exp %12 : vector<16x256xf32>
    %cst_5 = arith.constant 1.000000e+00 : f32
    %14 = vector.broadcast %cst_5 : f32 to vector<16x256xf32>
    %15 = arith.subf %13, %14 : vector<16x256xf32>
    %cst_6 = arith.constant 1.000000e+00 : f32
    %16 = vector.broadcast %cst_6 : f32 to vector<16x256xf32>
    %17 = arith.divf %16, %15 : vector<16x256xf32>
    %18 = vector.broadcast %9 : vector<1x256xf32> to vector<16x256xf32>
    %19 = arith.mulf %18, %17 : vector<16x256xf32>
    %c0_7 = arith.constant 0 : index
    %c0_8 = arith.constant 0 : index
    %20 = vector.load %arg4[%c0_7, %c0_8] : memref<16x256xf32, #tpu.memory_space<vmem>>, vector<16x256xf32>
    tpu.vector_store %arg4[%c0_7, %c0_8], %19 {strides = array<i32>} : memref<16x256xf32, #tpu.memory_space<vmem>>, vector<16x256xf32>,
    return
  }
  func.func @transform_0(%arg0: i32, %arg1: i32) -> (i32, i32) {
    %c0_i32 = arith.constant 0 : i32
    %c0_i32_0 = arith.constant 0 : i32
    return %arg0, %c0_i32 : i32, i32
  }
  func.func @transform_1(%arg0: i32, %arg1: i32) -> (i32, i32) {
    %c0_i32 = arith.constant 0 : i32
    %c0_i32_0 = arith.constant 0 : i32
    return %c0_i32, %arg1 : i32, i32
  }
  func.func @transform_2(%arg0: i32, %arg1: i32) -> (i32, i32) {
    %c0_i32 = arith.constant 0 : i32
    return %arg0, %arg1 : i32, i32
  }
}

</mosaic_0001>

<llo_original>
// kernel: tpu_custom_call.1
$region0: #{tpu_custom_call.1}
  #allocation0 [shape = 'u32[]', space=smem, size = 0x4, offset = 0x4, fixed_abs, tag = 'smem constant byte address 0x4 - core index']
  #allocation1 [shape = 'u32[144,128]{1,0:T(1,128)}', space=vmem, size = 0x12000, scoped, tag = 'internal scratch']
  %s0 = inlined_call_operand.vmem [shape: f32[16,1], index: 0, kind: input, shape index: {}]
  %s1 = inlined_call_operand.vmem [shape: f32[1,256], index: 1, kind: input, shape index: {}]
  %s2 = inlined_call_operand.hbm [shape: f32[16,256], index: 2, kind: output, shape index: {}]
  %s3 = sld [smem:[#allocation0]]
  $region18: #{tpu_custom_call.1} parent=0
    _
  %s5 = ssub.s32 1, %s3
  %s6 = scalar_select 0, %s5, %s3
  $region1: #{tpu_custom_call.1} parent=0
    #allocation2 [shape = 'u8[16384]{0}', space=vmem, size = 0x4000, scoped, tag = 'output window, operand 0, single buffered']
    #allocation3 [shape = 's32[1]{0}', space=sflag, size = 0x4, scoped, tag = 'scoped memory for tpu_custom_call.1']
    %7 = vsyncpa [#allocation3], 0
    // Predicated region
    $region2: #{tpu_custom_call.1} parent=1 // pred_check
      _
    $region3: #{tpu_custom_call.1} parent=1 // pred_check_branch
      %9 = sbr.rel (0) target = $region5
    $region4: #{tpu_custom_call.1} parent=1 // pred_region
      _
    $region5: #{tpu_custom_call.1} parent=1 // pred_fallthru
      _
    // Predicated region
    $region6: #{tpu_custom_call.1} parent=1 // pred_check
      _
    $region7: #{tpu_custom_call.1} parent=1 // pred_check_branch
      %11 = sbr.rel (0) target = $region9
    $region8: #{tpu_custom_call.1} parent=1 // pred_region
      _
    $region9: #{tpu_custom_call.1} parent=1 // pred_fallthru
      _
    %v12 = vld [vmem:[%s0] sm:$0xff]
    %v13 = vld [vmem:[%s0 + $0x8] sm:$0xff]
    %v14 = vld [vmem:[%s1] sm:$0x3]
    %v15 = vrcp.pop %v12
    %v16 = vmul.f32 1.0, %v15
    %v17 = vrcp.pop %v13
    %v18 = vmul.f32 1.0, %v17
    %v19 = vrcp.pop %v14
    %v20 = vmul.f32 0.014387769, %v19
    %v21 = vmul.f32 %v14, %v14
    %v22 = vmul.f32 %v21, %v21
    %v23 = vrcp.pop %v22
    %v24 = vmul.f32 5.995849e+08, %v23
    %v26 = vlaneseq
    %v27 = vshrl.u32 %v26, 7
    %v28 = vsub.s32 0, %v27
    %v29 = vrot.slane %v20, %v28
    %v30 = vlaneseq
    %v31 = vshrl.u32 %v30, 7
    %v32 = vsub.s32 1, %v31
    %v33 = vrot.slane %v20, %v32
    %37 = vset.pattern.permute.xlu0 0
    %38 = vperm.xlu0 %37, %v16
    %v39 = vpop.permute.xlu0 %38
    %42 = vset.pattern.permute.xlu0 0
    %43 = vperm.xlu0 %42, %v18
    %v44 = vpop.permute.xlu0 %43
    %v46 = vmul.f32 %v29, %v39
    %v47 = vmul.f32 %v33, %v39
    %v48 = vmul.f32 %v29, %v44
    %v49 = vmul.f32 %v33, %v44
    %v50 = vmul.f32 %v46, 1.442695
    %v51 = vpow.pop %v50
    %v52 = vmul.f32 %v47, 1.442695
    %v53 = vpow.pop %v52
    %v54 = vmul.f32 %v48, 1.442695
    %v55 = vpow.pop %v54
    %v56 = vmul.f32 %v49, 1.442695
    %v57 = vpow.pop %v56
    %v58 = vsub.f32 %v51, 1.0
    %v59 = vsub.f32 %v53, 1.0
    %v60 = vsub.f32 %v55, 1.0
    %v61 = vsub.f32 %v57, 1.0
    %v62 = vrcp.pop %v58
    %v63 = vmul.f32 1.0, %v62
    %v64 = vrcp.pop %v59
    %v65 = vmul.f32 1.0, %v64
    %v66 = vrcp.pop %v60
    %v67 = vmul.f32 1.0, %v66
    %v68 = vrcp.pop %v61
    %v69 = vmul.f32 1.0, %v68
    %v71 = vlaneseq
    %v72 = vshrl.u32 %v71, 7
    %v73 = vsub.s32 0, %v72
    %v74 = vrot.slane %v24, %v73
    %v75 = vlaneseq
    %v76 = vshrl.u32 %v75, 7
    %v77 = vsub.s32 1, %v76
    %v78 = vrot.slane %v24, %v77
    %v81 = vmul.f32 %v74, %v63
    %v82 = vmul.f32 %v78, %v65
    %v83 = vmul.f32 %v74, %v67
    %v84 = vmul.f32 %v78, %v69
    %85 = vst [vmem:[#allocation2] sm:$0xff] %v81
    %86 = vst [vmem:[#allocation2 + $0x8] sm:$0xff] %v82
    %87 = vst [vmem:[#allocation2 + $0x10] sm:$0xff] %v83
    %88 = vst [vmem:[#allocation2 + $0x18] sm:$0xff] %v84
    // Predicated region
    $region10: #{tpu_custom_call.1} parent=1 // pred_check
      _
    $region11: #{tpu_custom_call.1} parent=1 // pred_check_branch
      %90 = sbr.rel (0) target = $region13
    $region12: #{tpu_custom_call.1} parent=1 // pred_region
      %s92 = ssub.s32 512, 512
      %93 = vsyncadd [#allocation3], %s92
      %s94 = sshll.u32 [#allocation2], 4
      %s95 = int_to_ptr.vmem [resolvable:$true] %s94
      %100 = dma.vmem_to_hbm [thread:$0]  %s95, 512, %s2, [#allocation3], 256, 256, 16
    $region13: #{tpu_custom_call.1} parent=1 // pred_fallthru
      _
    // Predicated region
    $region14: #{tpu_custom_call.1} parent=1 // pred_check
      _
    $region15: #{tpu_custom_call.1} parent=1 // pred_check_branch
      %102 = sbr.rel (0) target = $region17
    $region16: #{tpu_custom_call.1} parent=1 // pred_region
      %103 = dma.done [#allocation3], 512
    $region17: #{tpu_custom_call.1} parent=1 // pred_fallthru
      _
    %104 = vsyncpa [#allocation3], 1

</llo_original>
